<compile_context>
chip_gen: v6e
topology: v6e:2x2x1
jax: 0.10.0
libtpu: 0.0.40
codegen_flags: <defaults>
</compile_context>

<pallas_src>
import functools
from dataclasses import dataclass
from typing import Callable, Optional

import numpy as np
import jax
import jax.numpy as jnp
from jax.experimental import pallas as pl
from jax.experimental.pallas import tpu as pltpu


def _round_up(x, m):
    return (x + m - 1) // m * m


def _cdiv(a, b):
    return (a + b - 1) // b


# ----------------------------- Pallas kernel -------------------------------
def _vbll_disc_kernel(x_ref, rhs_ref, noise_ref, sseg_ref, rrep_ref, bseg_ref,
                      ffold_ref, mask_ref, eps_ref, out_ref, *,
                      C, C_pad, CD_pad, GW, G, n_samples):
    """Processes one batch tile.

    x_ref    : VMEM (TILE_N, D)              batch tile (pipelined over the grid)
    rhs_ref  : VMEM (D, CD_pad + C_pad)      resident fused weights [L_c blocks | pad | W_mean^T]
    noise_ref: VMEM (2, C_pad)               row0 = noise_mean, row1 = exp(noise_logdiag)^2
    sseg_ref : VMEM (CD_pad, C_pad)          0/1 block-diag fold for the per-class quadratic form
    rrep_ref : VMEM (C_pad, GW)              0/1 replication of classes into packed sample slots
    bseg_ref : VMEM (GW, GW)                 0/1 within-slot all-ones blocks (softmax denominators)
    ffold_ref: VMEM (G*GW, C_pad)            0/1 fold of packed sample slots back onto classes
    mask_ref : VMEM (1, G*GW)                1.0 on valid packed lanes, 0.0 on padding/extra slots
    eps_ref  : VMEM (TILE_N, G*GW)           host-generated N(0,1) noise, packed layout
    out_ref  : VMEM (TILE_N, out_w)          packed lane-dense output [probs | mean | var | pad]
    """
    tile_n = x_ref.shape[0]

    # --- one fused MXU matmul: Cholesky projections + logit mean ------------
    big = jnp.dot(x_ref[...], rhs_ref[...], preferred_element_type=jnp.float32)
    u = big[:, :CD_pad]                                  # u[:, c*D+e] = (L_c^T x)[e]
    mean = big[:, CD_pad:] + noise_ref[0:1, :]           # (TILE_N, C_pad)

    # --- per-class quadratic form ||L_c^T x||^2 on the idle MXU -------------
    wx_var = jnp.dot(u * u, sseg_ref[...], preferred_element_type=jnp.float32)
    wx_var = jnp.maximum(wx_var, 1e-12)                  # torch.clip in DenseNormal.__matmul__
    var = jnp.maximum(wx_var + noise_ref[1:2, :], 1e-12)  # torch.clip in Normal.__add__
    std = jnp.sqrt(var)

    # --- hoisted softmax stabilizer: single XLU row-max reused by all samples
    col = jax.lax.broadcasted_iota(jnp.int32, (tile_n, C_pad), 1)
    m0 = jnp.max(jnp.where(col < C, mean + 5.0 * std, jnp.float32(-1e30)),
                 axis=-1, keepdims=True)                  # (TILE_N, 1)

    # --- replicate mean/std into the packed per-sample lane layout (MXU) ----
    mean_t = jnp.dot(mean, rrep_ref[...], preferred_element_type=jnp.float32)  # (TILE_N, GW)
    std_t = jnp.dot(std, rrep_ref[...], preferred_element_type=jnp.float32)    # (TILE_N, GW)

    # --- reparameterized sampling + softmax, packed into lanes --------------
    acc = jnp.zeros((tile_n, C_pad), jnp.float32)
    for g in range(G):                                   # G is tiny & static -> unrolled
        eps_g = eps_ref[:, g * GW:(g + 1) * GW]
        msk_g = mask_ref[:, g * GW:(g + 1) * GW]
        logits = mean_t + std_t * eps_g - m0
        logits = jnp.where(msk_g > 0.0, logits, jnp.float32(-1e30))
        p_un = jnp.exp(logits)                           # padding lanes underflow to exactly 0
        denom = jnp.dot(p_un, bseg_ref[...], preferred_element_type=jnp.float32)
        p_n = p_un / jnp.maximum(denom, jnp.float32(1e-30))   # exact softmax normalization
        acc = acc + jnp.dot(p_n, ffold_ref[g * GW:(g + 1) * GW, :],
                            preferred_element_type=jnp.float32)
    probs = jnp.clip(acc * jnp.float32(1.0 / n_samples), 0.0, 1.0)

    # --- packed lane-dense output slab [probs | mean | var | pad] -----------
    out_ref[...] = jnp.zeros(out_ref.shape, out_ref.dtype)
    out_ref[:, 0:C] = probs[:, :C]
    out_ref[:, C:2 * C] = mean[:, :C]
    out_ref[:, 2 * C:3 * C] = var[:, :C]


# ----------------------------- glue / wrapper -------------------------------
@dataclass
class VBLLReturn:
    predictive_probs: jnp.ndarray                  # stands in for Categorical(probs=...)
    train_loss_fn: Callable[[jnp.ndarray], jnp.ndarray]
    val_loss_fn: Callable[[jnp.ndarray], jnp.ndarray]
    ood_scores: Optional[jnp.ndarray] = None


def init_params(key, in_features, out_features):
    k1, k2, k3, k4 = jax.random.split(key, 4)
    return dict(
        noise_mean=jnp.zeros((out_features,), jnp.float32),
        noise_logdiag=jax.random.normal(k1, (out_features,), jnp.float32) - 1.0,
        W_mean=jax.random.normal(k2, (out_features, in_features), jnp.float32),
        W_logdiag=jax.random.normal(k3, (out_features, in_features), jnp.float32)
                  - 0.5 * float(np.log(in_features)),
        W_offdiag=jax.random.normal(k4, (out_features, in_features, in_features), jnp.float32)
                  / in_features,
    )


def _vmem_capacity_bytes():
    try:
        return int(pltpu.get_tpu_info().vmem_capacity_bytes)
    except Exception:
        return 64 * 1024 * 1024        # conservative fallback (v7x-sized)


def disc_classification_forward(params, x, sample_key, *,
                                n_samples=10,
                                regularization_weight=1.0,
                                prior_scale=1.0,
                                wishart_scale=1.0,
                                dof=1.0,
                                return_ood=False,
                                matmul_dtype=jnp.bfloat16,   # f32 accumulation always kept
                                batch_tile=512):
    N, D = x.shape
    C = params["W_mean"].shape[0]
    C_pad = _round_up(C, 128)                     # lane-dense width for per-class quantities
    CD = C * D
    CD_pad = _round_up(CD, 128)                   # 128-aligned u/mean split point in the fused RHS
    out_w = _round_up(3 * C, 128)                 # packed [probs|mean|var] output width

    # ---- parameter massaging (plain-JAX glue) ----
    # W cholesky factor  L_c = tril(W_offdiag_c, -1) + diag(exp(W_logdiag_c))       (C, D, D)
    L = jnp.tril(params["W_offdiag"], k=-1) + jax.vmap(jnp.diag)(jnp.exp(params["W_logdiag"]))
    # ltT[d, c*D + e] = L[c, d, e]  so  (x @ ltT)[n, c*D + e] = (L_c^T x_n)[e]
    ltT = jnp.transpose(L, (1, 0, 2)).reshape(D, CD)
    rhs = jnp.zeros((D, CD_pad + C_pad), jnp.float32)
    rhs = rhs.at[:, :CD].set(ltT)
    rhs = rhs.at[:, CD_pad:CD_pad + C].set(params["W_mean"].T)

    noise_pack = jnp.zeros((2, C_pad), jnp.float32)
    noise_pack = noise_pack.at[0, :C].set(params["noise_mean"])
    noise_pack = noise_pack.at[1, :C].set(jnp.exp(2.0 * params["noise_logdiag"]))

    # 0/1 fold for per-class quadratic form: S[c*D+e, c] = 1
    S = np.zeros((CD_pad, C_pad), np.float32)
    for c in range(C):
        S[c * D:(c + 1) * D, c] = 1.0

    # ---- lane-packed sampling layout: P samples per 128-lane group when C small ----
    if C <= 64:
        P = max(1, min(n_samples, 128 // C))
        GW = 128
    else:
        P = 1
        GW = C_pad
    G = _cdiv(n_samples, P)

    R = np.zeros((C_pad, GW), np.float32)          # class -> packed slot replication
    B = np.zeros((GW, GW), np.float32)             # within-slot all-ones (softmax denominators)
    for p in range(P):
        R[np.arange(C), p * C + np.arange(C)] = 1.0
        B[p * C:(p + 1) * C, p * C:(p + 1) * C] = 1.0
    F = np.zeros((G * GW, C_pad), np.float32)      # packed slot -> class fold (sum over samples)
    lane_mask = np.zeros((1, G * GW), np.float32)  # 1.0 on lanes belonging to a real sample
    s = 0
    for g in range(G):
        for p in range(P):
            if s < n_samples:
                F[g * GW + p * C + np.arange(C), np.arange(C)] = 1.0
                lane_mask[0, g * GW + p * C: g * GW + p * C + C] = 1.0
            s += 1

    # ---- batch tiling (>= 2 tiles when N allows, so both v7x TensorCores get work) ----
    tile_n = int(min(batch_tile, max(16, _round_up(_cdiv(N, 2), 16))))
    N_pad = _round_up(N, tile_n)
    x_pad = jnp.pad(x.astype(jnp.float32), ((0, N_pad - N), (0, 0)))

    x_in = x_pad.astype(matmul_dtype)
    rhs_in = rhs.astype(matmul_dtype)

    # Host-side reparameterization noise, already in the packed lane layout.
    eps = jax.random.normal(sample_key, (N_pad, G * GW), jnp.float32)

    # ---- VMEM budget (generation-aware cap, includes the big in-kernel temporaries) ----
    itemsize = jnp.dtype(matmul_dtype).itemsize
    W_tot = CD_pad + C_pad
    const_bytes = (D * W_tot * itemsize + CD_pad * C_pad * 4 + 2 * C_pad * 4
                   + C_pad * GW * 4 + GW * GW * 4 + G * GW * C_pad * 4 + G * GW * 4)
    tile_io = tile_n * (D * itemsize + G * GW * 4 + out_w * 4)
    tmp_bytes = tile_n * (2 * W_tot + CD_pad + 6 * GW + 4 * C_pad) * 4
    vmem_need = 2 * const_bytes + 2 * tile_io + tmp_bytes        # x2 = default double-buffering
    budget = int(_vmem_capacity_bytes() * 0.85)                  # leave compiler scratch headroom
    vmem_limit = int(min(budget, max(32 * 1024 * 1024, 2 * vmem_need)))

    kernel = functools.partial(_vbll_disc_kernel, C=C, C_pad=C_pad, CD_pad=CD_pad,
                               GW=GW, G=G, n_samples=n_samples)

    out_slab = pl.pallas_call(
        kernel,
        out_shape=jax.ShapeDtypeStruct((N_pad, out_w), jnp.float32),
        grid_spec=pltpu.PrefetchScalarGridSpec(
            num_scalar_prefetch=0,
            grid=(N_pad // tile_n,),
            in_specs=[
                pl.BlockSpec((tile_n, D), lambda i: (i, 0)),        # x: tiled over batch
                pl.BlockSpec((D, W_tot), lambda i: (0, 0)),         # fused weights: resident
                pl.BlockSpec((2, C_pad), lambda i: (0, 0)),         # noise pack: resident
                pl.BlockSpec((CD_pad, C_pad), lambda i: (0, 0)),    # quad-form fold: resident
                pl.BlockSpec((C_pad, GW), lambda i: (0, 0)),        # replication: resident
                pl.BlockSpec((GW, GW), lambda i: (0, 0)),           # denominator fold: resident
                pl.BlockSpec((G * GW, C_pad), lambda i: (0, 0)),    # sample fold: resident
                pl.BlockSpec((1, G * GW), lambda i: (0, 0)),        # lane validity: resident
                pl.BlockSpec((tile_n, G * GW), lambda i: (i, 0)),   # eps: tiled over batch
            ],
            out_specs=pl.BlockSpec((tile_n, out_w), lambda i: (i, 0)),
        ),
        compiler_params=pltpu.CompilerParams(
            dimension_semantics=("parallel",),     # batch tiles shard across TCs (v7x megacore)
            vmem_limit_bytes=vmem_limit,
        ),
    )(x_in, rhs_in, noise_pack, jnp.asarray(S), jnp.asarray(R), jnp.asarray(B),
      jnp.asarray(F), jnp.asarray(lane_mask), eps)

    probs = out_slab[:N, 0:C]
    mean = out_slab[:N, C:2 * C]
    var = out_slab[:N, 2 * C:3 * C]

    # ---- scalar (parameter-only) terms of the ELBO: plain-JAX glue ----
    dof_eff = (dof + C + 1.0) / 2.0
    # KL(W || prior)
    mse_term = jnp.sum(params["W_mean"] ** 2) / prior_scale
    trace_term = jnp.sum(jnp.sum(L ** 2, axis=(-1, -2)) / prior_scale)
    logdet_cov = 2.0 * jnp.sum(params["W_logdiag"], axis=-1)
    logdet_term = jnp.sum(D * jnp.log(prior_scale) - logdet_cov)
    kl_term = 0.5 * (mse_term + trace_term + logdet_term)
    # Wishart term on the noise precision
    logdet_precision = -2.0 * jnp.sum(params["noise_logdiag"])
    trace_precision = jnp.sum(jnp.exp(-2.0 * params["noise_logdiag"]))
    wishart_term = dof_eff * logdet_precision - 0.5 * wishart_scale * trace_precision

    def train_loss_fn(y):                                            # jensen bound
        linear_term = mean[jnp.arange(N), y]
        pre_lse = mean + 0.5 * var
        lse_term = jax.scipy.special.logsumexp(pre_lse, axis=-1)
        total_elbo = jnp.mean(linear_term - lse_term)
        total_elbo = total_elbo + regularization_weight * (wishart_term - kl_term)
        return -total_elbo

    def val_loss_fn(y):
        # tiny floor avoids -inf when a sampled predictive prob is exactly 0;
        # any nonzero probability is unaffected.
        p_y = jnp.maximum(probs[jnp.arange(N), y], 1e-38)
        return -jnp.mean(jnp.log(p_y))

    out = VBLLReturn(predictive_probs=probs,
                     train_loss_fn=train_loss_fn,
                     val_loss_fn=val_loss_fn)
    if return_ood:
        out.ood_scores = jnp.max(probs, axis=-1)
    return out


# ----------------------------------- main -----------------------------------
if __name__ == "__main__":
    IN_FEATURES = 32
    OUT_FEATURES = 8
    BATCH = 8

    key = jax.random.PRNGKey(0)
    kp, kx, ks = jax.random.split(key, 3)

    params = init_params(kp, IN_FEATURES, OUT_FEATURES)
    x = jax.random.normal(kx, (BATCH, IN_FEATURES), jnp.float32)

    ret = disc_classification_forward(params, x, ks,
                                      regularization_weight=1.0 / BATCH,
                                      return_ood=True)

    probs = jax.block_until_ready(ret.predictive_probs)
    y = jnp.zeros((BATCH,), jnp.int32)
    train_loss = jax.block_until_ready(ret.train_loss_fn(y))
    val_loss = jax.block_until_ready(ret.val_loss_fn(y))

    assert probs.shape == (BATCH, OUT_FEATURES)
    assert bool(jnp.all(jnp.isfinite(probs)))
    assert bool(jnp.all(probs >= 0.0)) and bool(jnp.all(probs <= 1.0))
    row_sums = jnp.sum(probs, axis=-1)
    assert bool(jnp.all(jnp.abs(row_sums - 1.0) < 1e-2))
    assert bool(jnp.isfinite(train_loss)) and bool(jnp.isfinite(val_loss))
    assert ret.ood_scores.shape == (BATCH,)
    print("KERNEL_OK")
</pallas_src>

<mosaic_0001>
module attributes {stable_mosaic.version = 11 : i64} {
  func.func @_vbll_disc_kernel(%arg0: i32, %arg1: memref<16x32xbf16, #tpu.memory_space<vmem>>, %arg2: memref<32x384xbf16, #tpu.memory_space<vmem>>, %arg3: memref<2x128xf32, #tpu.memory_space<vmem>>, %arg4: memref<256x128xf32, #tpu.memory_space<vmem>>, %arg5: memref<128x128xf32, #tpu.memory_space<vmem>>, %arg6: memref<128x128xf32, #tpu.memory_space<vmem>>, %arg7: memref<128x128xf32, #tpu.memory_space<vmem>>, %arg8: memref<1x128xf32, #tpu.memory_space<vmem>>, %arg9: memref<16x128xf32, #tpu.memory_space<vmem>>, %arg10: memref<16x128xf32, #tpu.memory_space<vmem>>) attributes {dimension_semantics = [#tpu.dimension_semantics<parallel>], iteration_bounds = array<i64: 1>, scalar_prefetch = 0 : i64, scratch_operands = 0 : i64, tpu.core_type = #tpu.core_type<tc>, window_params = [{transform_indices = @transform_0, window_bounds = array<i64: 16, 32>}, {pipeline_mode = #tpu.pipeline_mode<synchronous>, transform_indices = @transform_1, window_bounds = array<i64: 32, 384>}, {pipeline_mode = #tpu.pipeline_mode<synchronous>, transform_indices = @transform_2, window_bounds = array<i64: 2, 128>}, {pipeline_mode = #tpu.pipeline_mode<synchronous>, transform_indices = @transform_3, window_bounds = array<i64: 256, 128>}, {pipeline_mode = #tpu.pipeline_mode<synchronous>, transform_indices = @transform_4, window_bounds = array<i64: 128, 128>}, {pipeline_mode = #tpu.pipeline_mode<synchronous>, transform_indices = @transform_5, window_bounds = array<i64: 128, 128>}, {pipeline_mode = #tpu.pipeline_mode<synchronous>, transform_indices = @transform_6, window_bounds = array<i64: 128, 128>}, {pipeline_mode = #tpu.pipeline_mode<synchronous>, transform_indices = @transform_7, window_bounds = array<i64: 1, 128>}, {transform_indices = @transform_8, window_bounds = array<i64: 16, 128>}, {transform_indices = @transform_9, window_bounds = array<i64: 16, 128>}]} {
    %c0 = arith.constant 0 : index
    %c0_0 = arith.constant 0 : index
    %0 = vector.load %arg1[%c0, %c0_0] : memref<16x32xbf16, #tpu.memory_space<vmem>>, vector<16x32xbf16>
    %c0_1 = arith.constant 0 : index
    %c0_2 = arith.constant 0 : index
    %1 = vector.load %arg2[%c0_1, %c0_2] : memref<32x384xbf16, #tpu.memory_space<vmem>>, vector<32x384xbf16>
    %cst = arith.constant dense<0.000000e+00> : vector<16x384xf32>
    %2 = tpu.matmul %0, %1, %cst {dimension_numbers = #tpu.dot_dimension_numbers<[1], [0], [0], [1], [0, 0, 1, 1], [], []>} : vector<16x32xbf16>, vector<32x384xbf16>, vector<16x384xf32> -> vector<16x384xf32>
    %3 = vector.extract_strided_slice %2 {offsets = [0, 0], sizes = [16, 256], strides = [1, 1]} : vector<16x384xf32> to vector<16x256xf32>
    %4 = vector.extract_strided_slice %2 {offsets = [0, 256], sizes = [16, 128], strides = [1, 1]} : vector<16x384xf32> to vector<16x128xf32>
    %c0_3 = arith.constant 0 : index
    %c0_4 = arith.constant 0 : index
    %5 = vector.load %arg3[%c0_3, %c0_4] : memref<2x128xf32, #tpu.memory_space<vmem>>, vector<1x128xf32>
    %6 = vector.broadcast %5 : vector<1x128xf32> to vector<16x128xf32>
    %7 = arith.addf %4, %6 : vector<16x128xf32>
    %8 = arith.mulf %3, %3 : vector<16x256xf32>
    %c0_5 = arith.constant 0 : index
    %c0_6 = arith.constant 0 : index
    %9 = vector.load %arg4[%c0_5, %c0_6] : memref<256x128xf32, #tpu.memory_space<vmem>>, vector<256x128xf32>
    %cst_7 = arith.constant dense<0.000000e+00> : vector<16x128xf32>
    %10 = tpu.matmul %8, %9, %cst_7 {dimension_numbers = #tpu.dot_dimension_numbers<[1], [0], [0], [1], [0, 0, 1, 1], [], []>} : vector<16x256xf32>, vector<256x128xf32>, vector<16x128xf32> -> vector<16x128xf32>
    %cst_8 = arith.constant 9.99999996E-13 : f32
    %11 = vector.broadcast %cst_8 : f32 to vector<16x128xf32>
    %12 = arith.maximumf %10, %11 : vector<16x128xf32>
    %c1 = arith.constant 1 : index
    %c0_9 = arith.constant 0 : index
    %13 = vector.load %arg3[%c1, %c0_9] : memref<2x128xf32, #tpu.memory_space<vmem>>, vector<1x128xf32>
    %14 = vector.broadcast %13 : vector<1x128xf32> to vector<16x128xf32>
    %15 = arith.addf %12, %14 : vector<16x128xf32>
    %cst_10 = arith.constant 9.99999996E-13 : f32
    %16 = vector.broadcast %cst_10 : f32 to vector<16x128xf32>
    %17 = arith.maximumf %15, %16 : vector<16x128xf32>
    %18 = math.sqrt %17 : vector<16x128xf32>
    %19 = tpu.iota {dimensions = array<i32: 1>} : vector<16x128xi32>
    %c8_i32 = arith.constant 8 : i32
    %20 = vector.broadcast %c8_i32 : i32 to vector<16x128xi32>
    %21 = arith.cmpi slt, %19, %20 : vector<16x128xi32>
    %cst_11 = arith.constant 5.000000e+00 : f32
    %22 = vector.broadcast %cst_11 : f32 to vector<16x128xf32>
    %23 = arith.mulf %22, %18 : vector<16x128xf32>
    %24 = arith.addf %7, %23 : vector<16x128xf32>
    %cst_12 = arith.constant -1.000000e+30 : f32
    %25 = vector.broadcast %cst_12 : f32 to vector<16x128xf32>
    %26 = arith.select %21, %24, %25 : vector<16x128xi1>, vector<16x128xf32>
    %cst_13 = arith.constant dense<0xFF800000> : vector<16xf32>
    %27 = vector.multi_reduction <maximumf>, %26, %cst_13 [1] : vector<16x128xf32> to vector<16xf32>
    %28 = vector.shape_cast %27 : vector<16xf32> to vector<16x1xf32>
    %c0_14 = arith.constant 0 : index
    %c0_15 = arith.constant 0 : index
    %29 = vector.load %arg5[%c0_14, %c0_15] : memref<128x128xf32, #tpu.memory_space<vmem>>, vector<128x128xf32>
    %cst_16 = arith.constant dense<0.000000e+00> : vector<16x128xf32>
    %30 = tpu.matmul %7, %29, %cst_16 {dimension_numbers = #tpu.dot_dimension_numbers<[1], [0], [0], [1], [0, 0, 1, 1], [], []>} : vector<16x128xf32>, vector<128x128xf32>, vector<16x128xf32> -> vector<16x128xf32>
    %c0_17 = arith.constant 0 : index
    %c0_18 = arith.constant 0 : index
    %31 = vector.load %arg5[%c0_17, %c0_18] : memref<128x128xf32, #tpu.memory_space<vmem>>, vector<128x128xf32>
    %cst_19 = arith.constant dense<0.000000e+00> : vector<16x128xf32>
    %32 = tpu.matmul %18, %31, %cst_19 {dimension_numbers = #tpu.dot_dimension_numbers<[1], [0], [0], [1], [0, 0, 1, 1], [], []>} : vector<16x128xf32>, vector<128x128xf32>, vector<16x128xf32> -> vector<16x128xf32>
    %cst_20 = arith.constant 0.000000e+00 : f32
    %33 = vector.broadcast %cst_20 : f32 to vector<16x128xf32>
    %c0_21 = arith.constant 0 : index
    %c0_22 = arith.constant 0 : index
    %34 = vector.load %arg9[%c0_21, %c0_22] : memref<16x128xf32, #tpu.memory_space<vmem>>, vector<16x128xf32>
    %c0_23 = arith.constant 0 : index
    %c0_24 = arith.constant 0 : index
    %35 = vector.load %arg8[%c0_23, %c0_24] : memref<1x128xf32, #tpu.memory_space<vmem>>, vector<1x128xf32>
    %36 = arith.mulf %32, %34 : vector<16x128xf32>
    %37 = arith.addf %30, %36 : vector<16x128xf32>
    %38 = vector.broadcast %28 : vector<16x1xf32> to vector<16x128xf32>
    %39 = arith.subf %37, %38 : vector<16x128xf32>
    %cst_25 = arith.constant 0.000000e+00 : f32
    %40 = vector.broadcast %cst_25 : f32 to vector<1x128xf32>
    %41 = arith.cmpf ogt, %35, %40 : vector<1x128xf32>
    %cst_26 = arith.constant -1.000000e+30 : f32
    %42 = vector.shape_cast %41 : vector<1x128xi1> to vector<1x128xi1>
    %43 = vector.broadcast %42 : vector<1x128xi1> to vector<16x128xi1>
    %44 = vector.broadcast %cst_26 : f32 to vector<16x128xf32>
    %45 = arith.select %43, %39, %44 : vector<16x128xi1>, vector<16x128xf32>
    %46 = math.exp %45 : vector<16x128xf32>
    %c0_27 = arith.constant 0 : index
    %c0_28 = arith.constant 0 : index
    %47 = vector.load %arg6[%c0_27, %c0_28] : memref<128x128xf32, #tpu.memory_space<vmem>>, vector<128x128xf32>
    %cst_29 = arith.constant dense<0.000000e+00> : vector<16x128xf32>
    %48 = tpu.matmul %46, %47, %cst_29 {dimension_numbers = #tpu.dot_dimension_numbers<[1], [0], [0], [1], [0, 0, 1, 1], [], []>} : vector<16x128xf32>, vector<128x128xf32>, vector<16x128xf32> -> vector<16x128xf32>
    %cst_30 = arith.constant 1.000000e-30 : f32
    %49 = vector.broadcast %cst_30 : f32 to vector<16x128xf32>
    %50 = arith.maximumf %48, %49 : vector<16x128xf32>
    %51 = arith.divf %46, %50 : vector<16x128xf32>
    %c0_31 = arith.constant 0 : index
    %c0_32 = arith.constant 0 : index
    %52 = vector.load %arg7[%c0_31, %c0_32] : memref<128x128xf32, #tpu.memory_space<vmem>>, vector<128x128xf32>
    %cst_33 = arith.constant dense<0.000000e+00> : vector<16x128xf32>
    %53 = tpu.matmul %51, %52, %cst_33 {dimension_numbers = #tpu.dot_dimension_numbers<[1], [0], [0], [1], [0, 0, 1, 1], [], []>} : vector<16x128xf32>, vector<128x128xf32>, vector<16x128xf32> -> vector<16x128xf32>
    %54 = arith.addf %33, %53 : vector<16x128xf32>
    %cst_34 = arith.constant 1.000000e-01 : f32
    %55 = vector.broadcast %cst_34 : f32 to vector<16x128xf32>
    %56 = arith.mulf %54, %55 : vector<16x128xf32>
    %cst_35 = arith.constant 0.000000e+00 : f32
    %cst_36 = arith.constant 1.000000e+00 : f32
    %57 = vector.broadcast %cst_35 : f32 to vector<16x128xf32>
    %58 = arith.maximumf %57, %56 : vector<16x128xf32>
    %59 = vector.broadcast %cst_36 : f32 to vector<16x128xf32>
    %60 = arith.minimumf %59, %58 : vector<16x128xf32>
    %cst_37 = arith.constant 0.000000e+00 : f32
    %61 = vector.broadcast %cst_37 : f32 to vector<16x128xf32>
    %c0_38 = arith.constant 0 : index
    %c0_39 = arith.constant 0 : index
    %62 = vector.load %arg10[%c0_38, %c0_39] : memref<16x128xf32, #tpu.memory_space<vmem>>, vector<16x128xf32>
    tpu.vector_store %arg10[%c0_38, %c0_39], %61 {strides = array<i32>} : memref<16x128xf32, #tpu.memory_space<vmem>>, vector<16x128xf32>,
    %63 = vector.extract_strided_slice %60 {offsets = [0, 0], sizes = [16, 8], strides = [1, 1]} : vector<16x128xf32> to vector<16x8xf32>
    %c0_40 = arith.constant 0 : index
    %c0_41 = arith.constant 0 : index
    %64 = vector.load %arg10[%c0_40, %c0_41] : memref<16x128xf32, #tpu.memory_space<vmem>>, vector<16x8xf32>
    tpu.vector_store %arg10[%c0_40, %c0_41], %63 {strides = array<i32>} : memref<16x128xf32, #tpu.memory_space<vmem>>, vector<16x8xf32>,
    %65 = vector.extract_strided_slice %7 {offsets = [0, 0], sizes = [16, 8], strides = [1, 1]} : vector<16x128xf32> to vector<16x8xf32>
    %c0_42 = arith.constant 0 : index
    %c8 = arith.constant 8 : index
    %66 = vector.load %arg10[%c0_42, %c8] : memref<16x128xf32, #tpu.memory_space<vmem>>, vector<16x8xf32>
    tpu.vector_store %arg10[%c0_42, %c8], %65 {strides = array<i32>} : memref<16x128xf32, #tpu.memory_space<vmem>>, vector<16x8xf32>,
    %67 = vector.extract_strided_slice %17 {offsets = [0, 0], sizes = [16, 8], strides = [1, 1]} : vector<16x128xf32> to vector<16x8xf32>
    %c0_43 = arith.constant 0 : index
    %c16 = arith.constant 16 : index
    %68 = vector.load %arg10[%c0_43, %c16] : memref<16x128xf32, #tpu.memory_space<vmem>>, vector<16x8xf32>
    tpu.vector_store %arg10[%c0_43, %c16], %67 {strides = array<i32>} : memref<16x128xf32, #tpu.memory_space<vmem>>, vector<16x8xf32>,
    return
  }
  func.func @transform_0(%arg0: i32) -> (i32, i32) {
    %c0_i32 = arith.constant 0 : i32
    %c0_i32_0 = arith.constant 0 : i32
    return %arg0, %c0_i32 : i32, i32
  }
  func.func @transform_1(%arg0: i32) -> (i32, i32) {
    %c0_i32 = arith.constant 0 : i32
    %c0_i32_0 = arith.constant 0 : i32
    %c0_i32_1 = arith.constant 0 : i32
    return %c0_i32, %c0_i32_0 : i32, i32
  }
  func.func @transform_2(%arg0: i32) -> (i32, i32) {
    %c0_i32 = arith.constant 0 : i32
    %c0_i32_0 = arith.constant 0 : i32
    %c0_i32_1 = arith.constant 0 : i32
    return %c0_i32, %c0_i32_0 : i32, i32
  }
  func.func @transform_3(%arg0: i32) -> (i32, i32) {
    %c0_i32 = arith.constant 0 : i32
    %c0_i32_0 = arith.constant 0 : i32
    %c0_i32_1 = arith.constant 0 : i32
    return %c0_i32, %c0_i32_0 : i32, i32
  }
  func.func @transform_4(%arg0: i32) -> (i32, i32) {
    %c0_i32 = arith.constant 0 : i32
    %c0_i32_0 = arith.constant 0 : i32
    %c0_i32_1 = arith.constant 0 : i32
    return %c0_i32, %c0_i32_0 : i32, i32
  }
  func.func @transform_5(%arg0: i32) -> (i32, i32) {
    %c0_i32 = arith.constant 0 : i32
    %c0_i32_0 = arith.constant 0 : i32
    %c0_i32_1 = arith.constant 0 : i32
    return %c0_i32, %c0_i32_0 : i32, i32
  }
  func.func @transform_6(%arg0: i32) -> (i32, i32) {
    %c0_i32 = arith.constant 0 : i32
    %c0_i32_0 = arith.constant 0 : i32
    %c0_i32_1 = arith.constant 0 : i32
    return %c0_i32, %c0_i32_0 : i32, i32
  }
  func.func @transform_7(%arg0: i32) -> (i32, i32) {
    %c0_i32 = arith.constant 0 : i32
    %c0_i32_0 = arith.constant 0 : i32
    %c0_i32_1 = arith.constant 0 : i32
    return %c0_i32, %c0_i32_0 : i32, i32
  }
  func.func @transform_8(%arg0: i32) -> (i32, i32) {
    %c0_i32 = arith.constant 0 : i32
    %c0_i32_0 = arith.constant 0 : i32
    return %arg0, %c0_i32 : i32, i32
  }
  func.func @transform_9(%arg0: i32) -> (i32, i32) {
    %c0_i32 = arith.constant 0 : i32
    %c0_i32_0 = arith.constant 0 : i32
    return %arg0, %c0_i32 : i32, i32
  }
}

</mosaic_0001>

<llo_original>
// kernel: tpu_custom_call.1
$region0: #{tpu_custom_call.1}
  #allocation0 [shape = 'u32[]', space=smem, size = 0x4, offset = 0x4, fixed_abs, tag = 'smem constant byte address 0x4 - core index']
  #allocation1 [shape = 'u32[144,128]{1,0:T(1,128)}', space=vmem, size = 0x12000, scoped, tag = 'internal scratch']
  %s0 = inlined_call_operand.hbm [shape: bf16[16,32], index: 0, kind: input, shape index: {}]
  %s1 = inlined_call_operand.hbm [shape: bf16[32,384], index: 1, kind: input, shape index: {}]
  %s2 = inlined_call_operand.vmem [shape: f32[2,128], index: 2, kind: input, shape index: {}]
  %s3 = inlined_call_operand.hbm [shape: f32[256,128], index: 3, kind: input, shape index: {}]
  %s4 = inlined_call_operand.hbm [shape: f32[128,128], index: 4, kind: input, shape index: {}]
  %s5 = inlined_call_operand.hbm [shape: f32[128,128], index: 5, kind: input, shape index: {}]
  %s6 = inlined_call_operand.hbm [shape: f32[128,128], index: 6, kind: input, shape index: {}]
  %s7 = inlined_call_operand.vmem [shape: f32[1,128], index: 7, kind: input, shape index: {}]
  %s8 = inlined_call_operand.hbm [shape: f32[16,128], index: 8, kind: input, shape index: {}]
  %s9 = inlined_call_operand.hbm [shape: f32[16,128], index: 9, kind: output, shape index: {}]
  %s10 = sld [smem:[#allocation0]]
  $region74: #{tpu_custom_call.1} parent=0
    _
  %s12 = ssub.s32 1, %s10
  %s13 = scalar_select 0, %s12, %s10
  $region1: #{tpu_custom_call.1} parent=0
    #allocation2 [shape = 'u8[4096]{0}', space=vmem, size = 0x1000, scoped, tag = 'input window, operand 0, single buffered']
    #allocation3 [shape = 's32[1]{0}', space=sflag, size = 0x4, scoped, tag = 'scoped memory for tpu_custom_call.1']
    #allocation4 [shape = 's32[1]{0}', space=sflag, size = 0x4, scoped, tag = 'scoped memory for tpu_custom_call.1']
    #allocation5 [shape = 'u8[24576]{0}', space=vmem, size = 0x6000, scoped, tag = 'input window, operand 1, single buffered']
    #allocation6 [shape = 's32[1]{0}', space=sflag, size = 0x4, scoped, tag = 'scoped memory for tpu_custom_call.1']
    #allocation7 [shape = 'u8[131072]{0}', space=vmem, size = 0x20000, scoped, tag = 'input window, operand 3, single buffered']
    #allocation8 [shape = 'u8[65536]{0}', space=vmem, size = 0x10000, scoped, tag = 'input window, operand 4, single buffered']
    #allocation9 [shape = 's32[1]{0}', space=sflag, size = 0x4, scoped, tag = 'scoped memory for tpu_custom_call.1']
    #allocation10 [shape = 'u8[65536]{0}', space=vmem, size = 0x10000, scoped, tag = 'input window, operand 5, single buffered']
    #allocation11 [shape = 'u8[65536]{0}', space=vmem, size = 0x10000, scoped, tag = 'input window, operand 6, single buffered']
    #allocation12 [shape = 's32[1]{0}', space=sflag, size = 0x4, scoped, tag = 'scoped memory for tpu_custom_call.1']
    #allocation13 [shape = 'u8[8192]{0}', space=vmem, size = 0x2000, scoped, tag = 'input window, operand 8, single buffered']
    #allocation14 [shape = 'u8[8192]{0}', space=vmem, size = 0x2000, scoped, tag = 'output window, operand 0, single buffered']
    %14 = vsyncpa [#allocation3], 0
    %15 = vsyncpa [#allocation6], 0
    %16 = vsyncpa [#allocation9], 0
    %17 = vsyncpa [#allocation12], 0
    %18 = vsyncpa [#allocation4], 0
    // Predicated region
    $region2: #{tpu_custom_call.1} parent=1 // pred_check
      _
    $region3: #{tpu_custom_call.1} parent=1 // pred_check_branch
      %20 = sbr.rel (0) target = $region5
    $region4: #{tpu_custom_call.1} parent=1 // pred_region
      %s22 = ssub.s32 128, 128
      %23 = vsyncadd [#allocation3], %s22
      %s24 = sshll.u32 [#allocation2], 4
      %s25 = int_to_ptr.vmem [resolvable:$true] %s24
      %30 = dma.hbm_to_vmem [thread:$0]  %s0, 128, %s25, [#allocation3], 64, 64, 4
    $region5: #{tpu_custom_call.1} parent=1 // pred_fallthru
      _
    // Predicated region
    $region6: #{tpu_custom_call.1} parent=1 // pred_check
      _
    $region7: #{tpu_custom_call.1} parent=1 // pred_check_branch
      %32 = sbr.rel (0) target = $region9
    $region8: #{tpu_custom_call.1} parent=1 // pred_region
      %s34 = ssub.s32 768, 768
      %35 = vsyncadd [#allocation6], %s34
      %s36 = sshll.u32 [#allocation5], 4
      %s37 = int_to_ptr.vmem [resolvable:$true] %s36
      %42 = dma.hbm_to_vmem [thread:$0]  %s1, 768, %s37, [#allocation6], 192, 192, 12
    $region9: #{tpu_custom_call.1} parent=1 // pred_fallthru
      _
    // Predicated region
    $region10: #{tpu_custom_call.1} parent=1 // pred_check
      _
    $region11: #{tpu_custom_call.1} parent=1 // pred_check_branch
      %44 = sbr.rel (0) target = $region13
    $region12: #{tpu_custom_call.1} parent=1 // pred_region
      _
    $region13: #{tpu_custom_call.1} parent=1 // pred_fallthru
      _
    // Predicated region
    $region14: #{tpu_custom_call.1} parent=1 // pred_check
      _
    $region15: #{tpu_custom_call.1} parent=1 // pred_check_branch
      %46 = sbr.rel (0) target = $region17
    $region16: #{tpu_custom_call.1} parent=1 // pred_region
      %s48 = ssub.s32 4096, 4096
      %49 = vsyncadd [#allocation6], %s48
      %s50 = sshll.u32 [#allocation7], 4
      %s51 = int_to_ptr.vmem [resolvable:$true] %s50
      %56 = dma.hbm_to_vmem [thread:$0]  %s3, 4096, %s51, [#allocation6], 128, 128, 8
    $region17: #{tpu_custom_call.1} parent=1 // pred_fallthru
      _
    // Predicated region
    $region18: #{tpu_custom_call.1} parent=1 // pred_check
      _
    $region19: #{tpu_custom_call.1} parent=1 // pred_check_branch
      %58 = sbr.rel (0) target = $region21
    $region20: #{tpu_custom_call.1} parent=1 // pred_region
      %s60 = ssub.s32 2048, 2048
      %61 = vsyncadd [#allocation9], %s60
      %s62 = sshll.u32 [#allocation8], 4
      %s63 = int_to_ptr.vmem [resolvable:$true] %s62
      %68 = dma.hbm_to_vmem [thread:$0]  %s4, 2048, %s63, [#allocation9], 128, 128, 8
    $region21: #{tpu_custom_call.1} parent=1 // pred_fallthru
      _
    // Predicated region
    $region22: #{tpu_custom_call.1} parent=1 // pred_check
      _
    $region23: #{tpu_custom_call.1} parent=1 // pred_check_branch
      %70 = sbr.rel (0) target = $region25
    $region24: #{tpu_custom_call.1} parent=1 // pred_region
      %s72 = ssub.s32 2048, 2048
      %73 = vsyncadd [#allocation9], %s72
      %s74 = sshll.u32 [#allocation10], 4
      %s75 = int_to_ptr.vmem [resolvable:$true] %s74
      %80 = dma.hbm_to_vmem [thread:$0]  %s5, 2048, %s75, [#allocation9], 128, 128, 8
    $region25: #{tpu_custom_call.1} parent=1 // pred_fallthru
      _
    // Predicated region
    $region26: #{tpu_custom_call.1} parent=1 // pred_check
      _
    $region27: #{tpu_custom_call.1} parent=1 // pred_check_branch
      %82 = sbr.rel (0) target = $region29
    $region28: #{tpu_custom_call.1} parent=1 // pred_region
      %s84 = ssub.s32 2048, 2048
      %85 = vsyncadd [#allocation12], %s84
      %s86 = sshll.u32 [#allocation11], 4
      %s87 = int_to_ptr.vmem [resolvable:$true] %s86
      %92 = dma.hbm_to_vmem [thread:$0]  %s6, 2048, %s87, [#allocation12], 128, 128, 8
    $region29: #{tpu_custom_call.1} parent=1 // pred_fallthru
      _
    // Predicated region
    $region30: #{tpu_custom_call.1} parent=1 // pred_check
      _
    $region31: #{tpu_custom_call.1} parent=1 // pred_check_branch
      %94 = sbr.rel (0) target = $region33
    $region32: #{tpu_custom_call.1} parent=1 // pred_region
      _
    $region33: #{tpu_custom_call.1} parent=1 // pred_fallthru
      _
    // Predicated region
    $region34: #{tpu_custom_call.1} parent=1 // pred_check
      _
    $region35: #{tpu_custom_call.1} parent=1 // pred_check_branch
      %96 = sbr.rel (0) target = $region37
    $region36: #{tpu_custom_call.1} parent=1 // pred_region
      %s98 = ssub.s32 256, 256
      %99 = vsyncadd [#allocation12], %s98
      %s100 = sshll.u32 [#allocation13], 4
      %s101 = int_to_ptr.vmem [resolvable:$true] %s100
      %106 = dma.hbm_to_vmem [thread:$0]  %s8, 256, %s101, [#allocation12], 128, 128, 8
    $region37: #{tpu_custom_call.1} parent=1 // pred_fallthru
      _
    // Predicated region
    $region38: #{tpu_custom_call.1} parent=1 // pred_check
      _
    $region39: #{tpu_custom_call.1} parent=1 // pred_check_branch
      %108 = sbr.rel (0) target = $region41
    $region40: #{tpu_custom_call.1} parent=1 // pred_region
      %109 = dma.done [#allocation3], 128
    $region41: #{tpu_custom_call.1} parent=1 // pred_fallthru
      _
    // Predicated region
    $region42: #{tpu_custom_call.1} parent=1 // pred_check
      _
    $region43: #{tpu_custom_call.1} parent=1 // pred_check_branch
      %111 = sbr.rel (0) target = $region45
    $region44: #{tpu_custom_call.1} parent=1 // pred_region
      %112 = dma.done [#allocation6], 768
    $region45: #{tpu_custom_call.1} parent=1 // pred_fallthru
      _
    // Predicated region
    $region46: #{tpu_custom_call.1} parent=1 // pred_check
      _
    $region47: #{tpu_custom_call.1} parent=1 // pred_check_branch
      %114 = sbr.rel (0) target = $region49
    $region48: #{tpu_custom_call.1} parent=1 // pred_region
      %115 = dma.done [#allocation6], 4096
    $region49: #{tpu_custom_call.1} parent=1 // pred_fallthru
      _
    // Predicated region
    $region50: #{tpu_custom_call.1} parent=1 // pred_check
      _
    $region51: #{tpu_custom_call.1} parent=1 // pred_check_branch
      %117 = sbr.rel (0) target = $region53
    $region52: #{tpu_custom_call.1} parent=1 // pred_region
      %118 = dma.done [#allocation9], 2048
    $region53: #{tpu_custom_call.1} parent=1 // pred_fallthru
      _
    // Predicated region
    $region54: #{tpu_custom_call.1} parent=1 // pred_check
      _
    $region55: #{tpu_custom_call.1} parent=1 // pred_check_branch
      %120 = sbr.rel (0) target = $region57
    $region56: #{tpu_custom_call.1} parent=1 // pred_region
      %121 = dma.done [#allocation9], 2048
    $region57: #{tpu_custom_call.1} parent=1 // pred_fallthru
      _
    // Predicated region
    $region58: #{tpu_custom_call.1} parent=1 // pred_check
      _
    $region59: #{tpu_custom_call.1} parent=1 // pred_check_branch
      %123 = sbr.rel (0) target = $region61
    $region60: #{tpu_custom_call.1} parent=1 // pred_region
      %124 = dma.done [#allocation12], 2048
    $region61: #{tpu_custom_call.1} parent=1 // pred_fallthru
      _
    // Predicated region
    $region62: #{tpu_custom_call.1} parent=1 // pred_check
      _
    $region63: #{tpu_custom_call.1} parent=1 // pred_check_branch
      %126 = sbr.rel (0) target = $region65
    $region64: #{tpu_custom_call.1} parent=1 // pred_region
      %127 = dma.done [#allocation12], 256
    $region65: #{tpu_custom_call.1} parent=1 // pred_fallthru
      _
    %v129 = vld [vmem:[#allocation2] sm:$0xf]
    %v130 = vld [vmem:[#allocation2 + $0x4] sm:$0xf]
    %v131 = vld [vmem:[#allocation5] sm:$0xff]
    %v132 = vld [vmem:[#allocation5 + $0x8] sm:$0xf]
    %v133 = vld [vmem:[#allocation5 + $0xc] sm:$0xff]
    %v134 = vld [vmem:[#allocation5 + $0x14] sm:$0xf]
    %v135 = vld [vmem:[#allocation5 + $0x18] sm:$0xff]
    %v136 = vld [vmem:[#allocation5 + $0x20] sm:$0xf]
    %v137 = vld [vmem:[#allocation5 + $0x24] sm:$0xff]
    %v138 = vld [vmem:[#allocation5 + $0x2c] sm:$0xf]
    %v141 = vunpack.c.l.b16 %v129
    %v142 = vunpack.c.l.b16 %v130
    %v143 = vpack.c.b16 %v142, %v141
    %v152 = vunpack.c.l.b16 %v131
    %v153 = vunpack.c.h.b16 %v131
    %v154 = vunpack.c.l.b16 %v132
    %v155 = vunpack.c.l.b16 %v133
    %v156 = vunpack.c.h.b16 %v133
    %v157 = vunpack.c.l.b16 %v134
    %v158 = vunpack.c.l.b16 %v135
    %v159 = vunpack.c.h.b16 %v135
    %v160 = vunpack.c.l.b16 %v136
    %v161 = vunpack.c.l.b16 %v137
    %v162 = vunpack.c.h.b16 %v137
    %v163 = vunpack.c.l.b16 %v138
    %v164 = vpack.c.b16 %v155, %v152
    %v165 = vpack.c.b16 %v156, %v153
    %v166 = vpack.c.b16 %v157, %v154
    %v167 = vpack.c.b16 %v161, %v158
    %v168 = vpack.c.b16 %v162, %v159
    %v169 = vpack.c.b16 %v163, %v160
    %vm176 = vcmask 261120
    %v178 = vsel %vm176, %v143, 0
    %180 = vmatprep.subr.bf16.mxu0 0
    %181 = vmatpush1.bf16.msra.mxu0 0
    %182 = vmatprep.subr.bf16.mxu0 0
    %183 = vmatpush1.bf16.msra.mxu0 0
    %184 = vmatprep.subr.bf16.mxu0 0
    %185 = vmatpush1.bf16.msra.mxu0 0
    %186 = vmatprep.subr.bf16.mxu0 0
    %187 = vmatpush1.bf16.msra.mxu0 0
    %188 = vmatprep.subr.bf16.mxu0 0
    %189 = vmatpush1.bf16.msra.mxu0 0
    %190 = vmatprep.subr.bf16.mxu0 0
    %191 = vmatpush1.bf16.msra.mxu0 0
    %192 = vmatprep.subr.bf16.mxu0 %v168
    %193 = vmatpush1.bf16.msra.mxu0 %v167
    %194 = vmatprep.subr.bf16.mxu0 %v165
    %195 = vmatpush1.bf16.msra.mxu0 %v164
    %196 = vmatprep.subr.bf16.mxu0 0
    %197 = vmatpush2.bf16.msra.mxu0 0
    %198 = vmatprep.subr.bf16.mxu0 0
    %199 = vmatpush2.bf16.msra.mxu0 0
    %200 = vmatprep.subr.bf16.mxu0 0
    %201 = vmatpush2.bf16.msra.mxu0 0
    %202 = vmatprep.subr.bf16.mxu0 0
    %203 = vmatpush2.bf16.msra.mxu0 0
    %204 = vmatprep.subr.bf16.mxu0 0
    %205 = vmatpush2.bf16.msra.mxu0 0
    %206 = vmatprep.subr.bf16.mxu0 0
    %207 = vmatpush2.bf16.msra.mxu0 0
    %208 = vmatprep.subr.bf16.mxu0 0
    %209 = vmatpush2.bf16.msra.mxu0 0
    %210 = vmatprep.subr.bf16.mxu0 0
    %211 = vmatpush2.bf16.msra.mxu0 0
    %212 = vmatprep.mubr.bf16.mxu0 0
    %213 = vmatmul.mubr.bf16.gmra.mxu0 %v178
    %v214 = vpop.f32.mrf.mxu0
    %v215 = vadd.f32 0.0, %v214
    %v216 = vpop.f32.mrf.mxu0
    %v217 = vadd.f32 0.0, %v216
    %v218 = vpop.f32.mrf.mxu0
    %v219 = vadd.f32 0.0, %v218
    %v220 = vpop.f32.mrf.mxu0
    %v221 = vadd.f32 0.0, %v220
    %222 = vdwg.mxu0
    %223 = vmatprep.subr.bf16.mxu0 0
    %224 = vmatpush1.bf16.msra.mxu0 0
    %225 = vmatprep.subr.bf16.mxu0 0
    %226 = vmatpush1.bf16.msra.mxu0 0
    %227 = vmatprep.subr.bf16.mxu0 0
    %228 = vmatpush1.bf16.msra.mxu0 0
    %229 = vmatprep.subr.bf16.mxu0 0
    %230 = vmatpush1.bf16.msra.mxu0 0
    %231 = vmatprep.subr.bf16.mxu0 0
    %232 = vmatpush1.bf16.msra.mxu0 0
    %233 = vmatprep.subr.bf16.mxu0 0
    %234 = vmatpush1.bf16.msra.mxu0 0
    %235 = vmatprep.subr.bf16.mxu0 0
    %236 = vmatpush1.bf16.msra.mxu0 %v169
    %237 = vmatprep.subr.bf16.mxu0 0
    %238 = vmatpush1.bf16.msra.mxu0 %v166
    %239 = vmatprep.subr.bf16.mxu0 0
    %240 = vmatpush2.bf16.msra.mxu0 0
    %241 = vmatprep.subr.bf16.mxu0 0
    %242 = vmatpush2.bf16.msra.mxu0 0
    %243 = vmatprep.subr.bf16.mxu0 0
    %244 = vmatpush2.bf16.msra.mxu0 0
    %245 = vmatprep.subr.bf16.mxu0 0
    %246 = vmatpush2.bf16.msra.mxu0 0
    %247 = vmatprep.subr.bf16.mxu0 0
    %248 = vmatpush2.bf16.msra.mxu0 0
    %249 = vmatprep.subr.bf16.mxu0 0
    %250 = vmatpush2.bf16.msra.mxu0 0
    %251 = vmatprep.subr.bf16.mxu0 0
    %252 = vmatpush2.bf16.msra.mxu0 0
    %253 = vmatprep.subr.bf16.mxu0 0
    %254 = vmatpush2.bf16.msra.mxu0 0
    %255 = vmatprep.mubr.bf16.mxu0 0
    %256 = vmatmul.mubr.bf16.gmra.mxu0 %v178
    %v257 = vpop.f32.mrf.mxu0
    %v258 = vadd.f32 0.0, %v257
    %v259 = vpop.f32.mrf.mxu0
    %v260 = vpop.f32.mrf.mxu0
    %v261 = vadd.f32 0.0, %v260
    %v262 = vpop.f32.mrf.mxu0
    %263 = vdwg.mxu0
    %v264 = vld [vmem:[%s2] sm:$0x1]
    %v265 = vlaneseq
    %v266 = vshrl.u32 %v265, 7
    %v267 = vsub.s32 0, %v266
    %v268 = vrot.slane %v264, %v267
    %v269 = vadd.f32 %v258, %v268
    %v270 = vadd.f32 %v261, %v268
    %v271 = vmul.f32 %v215, %v215
    %v272 = vmul.f32 %v217, %v217
    %v273 = vmul.f32 %v219, %v219
    %v274 = vmul.f32 %v221, %v221
    %v275 = vld [vmem:[#allocation7] sm:$0xff]
    %v276 = vld [vmem:[#allocation7 + $0x8] sm:$0xff]
    %v277 = vld [vmem:[#allocation7 + $0x10] sm:$0xff]
    %v278 = vld [vmem:[#allocation7 + $0x18] sm:$0xff]
    %v279 = vld [vmem:[#allocation7 + $0x20] sm:$0xff]
    %v280 = vld [vmem:[#allocation7 + $0x28] sm:$0xff]
    %v281 = vld [vmem:[#allocation7 + $0x30] sm:$0xff]
    %v282 = vld [vmem:[#allocation7 + $0x38] sm:$0xff]
    %v283 = vld [vmem:[#allocation7 + $0x40] sm:$0xff]
    %v284 = vld [vmem:[#allocation7 + $0x48] sm:$0xff]
    %v285 = vld [vmem:[#allocation7 + $0x50] sm:$0xff]
    %v286 = vld [vmem:[#allocation7 + $0x58] sm:$0xff]
    %v287 = vld [vmem:[#allocation7 + $0x60] sm:$0xff]
    %v288 = vld [vmem:[#allocation7 + $0x68] sm:$0xff]
    %v289 = vld [vmem:[#allocation7 + $0x70] sm:$0xff]
    %v290 = vld [vmem:[#allocation7 + $0x78] sm:$0xff]
    %v291 = vld [vmem:[#allocation7 + $0x80] sm:$0xff]
    %v292 = vld [vmem:[#allocation7 + $0x88] sm:$0xff]
    %v293 = vld [vmem:[#allocation7 + $0x90] sm:$0xff]
    %v294 = vld [vmem:[#allocation7 + $0x98] sm:$0xff]
    %v295 = vld [vmem:[#allocation7 + $0xa0] sm:$0xff]
    %v296 = vld [vmem:[#allocation7 + $0xa8] sm:$0xff]
    %v297 = vld [vmem:[#allocation7 + $0xb0] sm:$0xff]
    %v298 = vld [vmem:[#allocation7 + $0xb8] sm:$0xff]
    %v299 = vld [vmem:[#allocation7 + $0xc0] sm:$0xff]
    %v300 = vld [vmem:[#allocation7 + $0xc8] sm:$0xff]
    %v301 = vld [vmem:[#allocation7 + $0xd0] sm:$0xff]
    %v302 = vld [vmem:[#allocation7 + $0xd8] sm:$0xff]
    %v303 = vld [vmem:[#allocation7 + $0xe0] sm:$0xff]
    %v304 = vld [vmem:[#allocation7 + $0xe8] sm:$0xff]
    %v305 = vld [vmem:[#allocation7 + $0xf0] sm:$0xff]
    %v306 = vld [vmem:[#allocation7 + $0xf8] sm:$0xff]
    %307 = vmatprep.subr.mxu0 0.0
    %308 = vmatpush1.msra.mxu0 %v290
    %309 = vmatprep.subr.mxu0 0.0
    %310 = vmatpush1.msra.mxu0 %v289
    %311 = vmatprep.subr.mxu0 0.0
    %312 = vmatpush1.msra.mxu0 %v288
    %313 = vmatprep.subr.mxu0 0.0
    %314 = vmatpush1.msra.mxu0 %v287
    %315 = vmatprep.subr.mxu0 0.0
    %316 = vmatpush1.msra.mxu0 %v286
    %317 = vmatprep.subr.mxu0 0.0
    %318 = vmatpush1.msra.mxu0 %v285
    %319 = vmatprep.subr.mxu0 0.0
    %320 = vmatpush1.msra.mxu0 %v284
    %321 = vmatprep.subr.mxu0 0.0
    %322 = vmatpush1.msra.mxu0 %v283
    %323 = vmatprep.subr.mxu0 0.0
    %324 = vmatpush1.msra.mxu0 %v282
    %325 = vmatprep.subr.mxu0 0.0
    %326 = vmatpush1.msra.mxu0 %v281
    %327 = vmatprep.subr.mxu0 0.0
    %328 = vmatpush1.msra.mxu0 %v280
    %329 = vmatprep.subr.mxu0 0.0
    %330 = vmatpush1.msra.mxu0 %v279
    %331 = vmatprep.subr.mxu0 0.0
    %332 = vmatpush1.msra.mxu0 %v278
    %333 = vmatprep.subr.mxu0 0.0
    %334 = vmatpush1.msra.mxu0 %v277
    %335 = vmatprep.subr.mxu0 0.0
    %336 = vmatpush1.msra.mxu0 %v276
    %337 = vmatprep.subr.mxu0 0.0
    %338 = vmatpush1.msra.mxu0 %v275
    %339 = vmatprep.subr.mxu0 0.0
    %340 = vmatpush2.msra.mxu0 %v306
    %341 = vmatprep.subr.mxu0 0.0
    %342 = vmatpush2.msra.mxu0 %v305
    %343 = vmatprep.subr.mxu0 0.0
    %344 = vmatpush2.msra.mxu0 %v304
    %345 = vmatprep.subr.mxu0 0.0
    %346 = vmatpush2.msra.mxu0 %v303
    %347 = vmatprep.subr.mxu0 0.0
    %348 = vmatpush2.msra.mxu0 %v302
    %349 = vmatprep.subr.mxu0 0.0
    %350 = vmatpush2.msra.mxu0 %v301
    %351 = vmatprep.subr.mxu0 0.0
    %352 = vmatpush2.msra.mxu0 %v300
    %353 = vmatprep.subr.mxu0 0.0
    %354 = vmatpush2.msra.mxu0 %v299
    %355 = vmatprep.subr.mxu0 0.0
    %356 = vmatpush2.msra.mxu0 %v298
    %357 = vmatprep.subr.mxu0 0.0
    %358 = vmatpush2.msra.mxu0 %v297
    %359 = vmatprep.subr.mxu0 0.0
    %360 = vmatpush2.msra.mxu0 %v296
    %361 = vmatprep.subr.mxu0 0.0
    %362 = vmatpush2.msra.mxu0 %v295
    %363 = vmatprep.subr.mxu0 0.0
    %364 = vmatpush2.msra.mxu0 %v294
    %365 = vmatprep.subr.mxu0 0.0
    %366 = vmatpush2.msra.mxu0 %v293
    %367 = vmatprep.subr.mxu0 0.0
    %368 = vmatpush2.msra.mxu0 %v292
    %369 = vmatprep.subr.mxu0 0.0
    %370 = vmatpush2.msra.mxu0 %v291
    %371 = vmatprep.mubr.f32.mxu0 %v272
    %372 = vmatmul.mubr.f32.gmra.mxu0 %v271
    %v373 = vpop.f32.mrf.mxu0
    %v374 = vadd.f32 0.0, %v373
    %v375 = vpop.f32.mrf.mxu0
    %376 = vmatprep.mubr.f32.mxu0 %v274
    %377 = vmatmul.mubr.f32.gmra.mxu0 %v273
    %v378 = vpop.f32.mrf.mxu0
    %v379 = vadd.f32 0.0, %v378
    %v380 = vpop.f32.mrf.mxu0
    %381 = vdwg.mxu0
    %v382 = vmax.f32 %v374, 1e-12
    %v383 = vmax.f32 %v379, 1e-12
    %v384 = vld [vmem:[%s2 + $0x1] sm:$0x1]
    %v385 = vlaneseq
    %v386 = vshrl.u32 %v385, 7
    %v387 = vsub.s32 0, %v386
    %v388 = vrot.slane %v384, %v387
    %v389 = vadd.f32 %v382, %v388
    %v390 = vadd.f32 %v383, %v388
    %v391 = vmax.f32 %v389, 1e-12
    %v392 = vmax.f32 %v390, 1e-12
    %v393 = vrsqrt.pop %v391
    %v394 = vmul.f32 %v391, %v393
    %vm395 = vcmp.eq.f32.partialorder %v391, inf
    %v396 = vsel %vm395, %v391, %v394
    %vm397 = vcmp.eq.f32.partialorder %v391, 0.0
    %v398 = vand.u32 %v391, 2147483648
    %v399 = vsel %vm397, %v398, %v396
    %v400 = vrsqrt.pop %v392
    %v401 = vmul.f32 %v392, %v400
    %vm402 = vcmp.eq.f32.partialorder %v392, inf
    %v403 = vsel %vm402, %v392, %v401
    %vm404 = vcmp.eq.f32.partialorder %v392, 0.0
    %v405 = vand.u32 %v392, 2147483648
    %v406 = vsel %vm404, %v405, %v403
    %v407 = vlaneseq
    %v408 = vand.u32 %v407, 127
    %vm409 = vcmp.lt.s32.totalorder %v408, 8
    %v410 = vmul.f32 %v399, 5.0
    %v411 = vmul.f32 %v406, 5.0
    %v412 = vadd.f32 %v269, %v410
    %v413 = vadd.f32 %v270, %v411
    %v414 = vsel %vm409, %v412, -1e+30
    %v415 = vsel %vm409, %v413, -1e+30
    %416 = vmax.xlane.f32.xlu0 %v414
    %v417 = vpop.xlane.xlu0 %416
    %418 = vmax.xlane.f32.xlu0 %v415
    %v419 = vpop.xlane.xlu0 %418
    %v420 = vld [vmem:[#allocation8] sm:$0xff]
    %v421 = vld [vmem:[#allocation8 + $0x8] sm:$0xff]
    %v422 = vld [vmem:[#allocation8 + $0x10] sm:$0xff]
    %v423 = vld [vmem:[#allocation8 + $0x18] sm:$0xff]
    %v424 = vld [vmem:[#allocation8 + $0x20] sm:$0xff]
    %v425 = vld [vmem:[#allocation8 + $0x28] sm:$0xff]
    %v426 = vld [vmem:[#allocation8 + $0x30] sm:$0xff]
    %v427 = vld [vmem:[#allocation8 + $0x38] sm:$0xff]
    %v428 = vld [vmem:[#allocation8 + $0x40] sm:$0xff]
    %v429 = vld [vmem:[#allocation8 + $0x48] sm:$0xff]
    %v430 = vld [vmem:[#allocation8 + $0x50] sm:$0xff]
    %v431 = vld [vmem:[#allocation8 + $0x58] sm:$0xff]
    %v432 = vld [vmem:[#allocation8 + $0x60] sm:$0xff]
    %v433 = vld [vmem:[#allocation8 + $0x68] sm:$0xff]
    %v434 = vld [vmem:[#allocation8 + $0x70] sm:$0xff]
    %v435 = vld [vmem:[#allocation8 + $0x78] sm:$0xff]
    %436 = vmatprep.subr.mxu0 0.0
    %437 = vmatpush1.msra.mxu0 %v435
    %438 = vmatprep.subr.mxu0 0.0
    %439 = vmatpush1.msra.mxu0 %v434
    %440 = vmatprep.subr.mxu0 0.0
    %441 = vmatpush1.msra.mxu0 %v433
    %442 = vmatprep.subr.mxu0 0.0
    %443 = vmatpush1.msra.mxu0 %v432
    %444 = vmatprep.subr.mxu0 0.0
    %445 = vmatpush1.msra.mxu0 %v431
    %446 = vmatprep.subr.mxu0 0.0
    %447 = vmatpush1.msra.mxu0 %v430
    %448 = vmatprep.subr.mxu0 0.0
    %449 = vmatpush1.msra.mxu0 %v429
    %450 = vmatprep.subr.mxu0 0.0
    %451 = vmatpush1.msra.mxu0 %v428
    %452 = vmatprep.subr.mxu0 0.0
    %453 = vmatpush1.msra.mxu0 %v427
    %454 = vmatprep.subr.mxu0 0.0
    %455 = vmatpush1.msra.mxu0 %v426
    %456 = vmatprep.subr.mxu0 0.0
    %457 = vmatpush1.msra.mxu0 %v425
    %458 = vmatprep.subr.mxu0 0.0
    %459 = vmatpush1.msra.mxu0 %v424
    %460 = vmatprep.subr.mxu0 0.0
    %461 = vmatpush1.msra.mxu0 %v423
    %462 = vmatprep.subr.mxu0 0.0
    %463 = vmatpush1.msra.mxu0 %v422
    %464 = vmatprep.subr.mxu0 0.0
    %465 = vmatpush1.msra.mxu0 %v421
    %466 = vmatprep.subr.mxu0 0.0
    %467 = vmatpush1.msra.mxu0 %v420
    %468 = vmatprep.subr.mxu0 0.0
    %469 = vmatpush2.msra.mxu0 0.0
    %470 = vmatprep.subr.mxu0 0.0
    %471 = vmatpush2.msra.mxu0 0.0
    %472 = vmatprep.subr.mxu0 0.0
    %473 = vmatpush2.msra.mxu0 0.0
    %474 = vmatprep.subr.mxu0 0.0
    %475 = vmatpush2.msra.mxu0 0.0
    %476 = vmatprep.subr.mxu0 0.0
    %477 = vmatpush2.msra.mxu0 0.0
    %478 = vmatprep.subr.mxu0 0.0
    %479 = vmatpush2.msra.mxu0 0.0
    %480 = vmatprep.subr.mxu0 0.0
    %481 = vmatpush2.msra.mxu0 0.0
    %482 = vmatprep.subr.mxu0 0.0
    %483 = vmatpush2.msra.mxu0 0.0
    %484 = vmatprep.subr.mxu0 0.0
    %485 = vmatpush2.msra.mxu0 0.0
    %486 = vmatprep.subr.mxu0 0.0
    %487 = vmatpush2.msra.mxu0 0.0
    %488 = vmatprep.subr.mxu0 0.0
    %489 = vmatpush2.msra.mxu0 0.0
    %490 = vmatprep.subr.mxu0 0.0
    %491 = vmatpush2.msra.mxu0 0.0
    %492 = vmatprep.subr.mxu0 0.0
    %493 = vmatpush2.msra.mxu0 0.0
    %494 = vmatprep.subr.mxu0 0.0
    %495 = vmatpush2.msra.mxu0 0.0
    %496 = vmatprep.subr.mxu0 0.0
    %497 = vmatpush2.msra.mxu0 0.0
    %498 = vmatprep.subr.mxu0 0.0
    %499 = vmatpush2.msra.mxu0 0.0
    %500 = vmatprep.mubr.f32.mxu0 0.0
    %501 = vmatmul.mubr.f32.gmra.mxu0 %v399
    %v502 = vpop.f32.mrf.mxu0
    %v503 = vadd.f32 0.0, %v502
    %v504 = vpop.f32.mrf.mxu0
    %505 = vmatprep.mubr.f32.mxu0 0.0
    %506 = vmatmul.mubr.f32.gmra.mxu0 %v406
    %v507 = vpop.f32.mrf.mxu0
    %v508 = vadd.f32 0.0, %v507
    %v509 = vpop.f32.mrf.mxu0
    %510 = vdwg.mxu0
    %v511 = vld [vmem:[#allocation13] sm:$0xff]
    %v512 = vld [vmem:[#allocation13 + $0x8] sm:$0xff]
    %v513 = vld [vmem:[%s7] sm:$0x1]
    %v514 = vmul.f32 %v503, %v511
    %v515 = vmul.f32 %v508, %v512
    %516 = vmatprep.subr.mxu0 0.0
    %517 = vmatpush1.msra.mxu0 %v435
    %518 = vmatprep.subr.mxu0 0.0
    %519 = vmatpush1.msra.mxu0 %v434
    %520 = vmatprep.subr.mxu0 0.0
    %521 = vmatpush1.msra.mxu0 %v433
    %522 = vmatprep.subr.mxu0 0.0
    %523 = vmatpush1.msra.mxu0 %v432
    %524 = vmatprep.subr.mxu0 0.0
    %525 = vmatpush1.msra.mxu0 %v431
    %526 = vmatprep.subr.mxu0 0.0
    %527 = vmatpush1.msra.mxu0 %v430
    %528 = vmatprep.subr.mxu0 0.0
    %529 = vmatpush1.msra.mxu0 %v429
    %530 = vmatprep.subr.mxu0 0.0
    %531 = vmatpush1.msra.mxu0 %v428
    %532 = vmatprep.subr.mxu0 0.0
    %533 = vmatpush1.msra.mxu0 %v427
    %534 = vmatprep.subr.mxu0 0.0
    %535 = vmatpush1.msra.mxu0 %v426
    %536 = vmatprep.subr.mxu0 0.0
    %537 = vmatpush1.msra.mxu0 %v425
    %538 = vmatprep.subr.mxu0 0.0
    %539 = vmatpush1.msra.mxu0 %v424
    %540 = vmatprep.subr.mxu0 0.0
    %541 = vmatpush1.msra.mxu0 %v423
    %542 = vmatprep.subr.mxu0 0.0
    %543 = vmatpush1.msra.mxu0 %v422
    %544 = vmatprep.subr.mxu0 0.0
    %545 = vmatpush1.msra.mxu0 %v421
    %546 = vmatprep.subr.mxu0 0.0
    %547 = vmatpush1.msra.mxu0 %v420
    %548 = vmatprep.subr.mxu0 0.0
    %549 = vmatpush2.msra.mxu0 0.0
    %550 = vmatprep.subr.mxu0 0.0
    %551 = vmatpush2.msra.mxu0 0.0
    %552 = vmatprep.subr.mxu0 0.0
    %553 = vmatpush2.msra.mxu0 0.0
    %554 = vmatprep.subr.mxu0 0.0
    %555 = vmatpush2.msra.mxu0 0.0
    %556 = vmatprep.subr.mxu0 0.0
    %557 = vmatpush2.msra.mxu0 0.0
    %558 = vmatprep.subr.mxu0 0.0
    %559 = vmatpush2.msra.mxu0 0.0
    %560 = vmatprep.subr.mxu0 0.0
    %561 = vmatpush2.msra.mxu0 0.0
    %562 = vmatprep.subr.mxu0 0.0
    %563 = vmatpush2.msra.mxu0 0.0
    %564 = vmatprep.subr.mxu0 0.0
    %565 = vmatpush2.msra.mxu0 0.0
    %566 = vmatprep.subr.mxu0 0.0
    %567 = vmatpush2.msra.mxu0 0.0
    %568 = vmatprep.subr.mxu0 0.0
    %569 = vmatpush2.msra.mxu0 0.0
    %570 = vmatprep.subr.mxu0 0.0
    %571 = vmatpush2.msra.mxu0 0.0
    %572 = vmatprep.subr.mxu0 0.0
    %573 = vmatpush2.msra.mxu0 0.0
    %574 = vmatprep.subr.mxu0 0.0
    %575 = vmatpush2.msra.mxu0 0.0
    %576 = vmatprep.subr.mxu0 0.0
    %577 = vmatpush2.msra.mxu0 0.0
    %578 = vmatprep.subr.mxu0 0.0
    %579 = vmatpush2.msra.mxu0 0.0
    %580 = vmatprep.mubr.f32.mxu0 0.0
    %581 = vmatmul.mubr.f32.gmra.mxu0 %v269
    %v582 = vpop.f32.mrf.mxu0
    %v583 = vadd.f32 %v514, %v582
    %v584 = vpop.f32.mrf.mxu0
    %585 = vmatprep.mubr.f32.mxu0 0.0
    %586 = vmatmul.mubr.f32.gmra.mxu0 %v270
    %v587 = vpop.f32.mrf.mxu0
    %v588 = vadd.f32 %v515, %v587
    %v589 = vpop.f32.mrf.mxu0
    %590 = vdwg.mxu0
    %v591 = vsub.f32 %v583, %v417
    %v592 = vsub.f32 %v588, %v419
    %vm593 = vcmp.gt.f32.partialorder %v513, 0.0
    %v594 = vsel %vm593, 1, 0
    %v595 = vlaneseq
    %v596 = vshrl.u32 %v595, 7
    %v597 = vsub.s32 0, %v596
    %v598 = vrot.slane %v594, %v597
    %vm599 = vcmp.eq.s32.totalorder %v598, 1
    %v600 = vsel %vm599, %v591, -1e+30
    %v601 = vsel %vm599, %v592, -1e+30
    %v602 = vmul.f32 %v600, 1.442695
    %v603 = vpow.pop %v602
    %v604 = vmul.f32 %v601, 1.442695
    %v605 = vpow.pop %v604
    %v606 = vld [vmem:[#allocation10] sm:$0xff]
    %v607 = vld [vmem:[#allocation10 + $0x8] sm:$0xff]
    %v608 = vld [vmem:[#allocation10 + $0x10] sm:$0xff]
    %v609 = vld [vmem:[#allocation10 + $0x18] sm:$0xff]
    %v610 = vld [vmem:[#allocation10 + $0x20] sm:$0xff]
    %v611 = vld [vmem:[#allocation10 + $0x28] sm:$0xff]
    %v612 = vld [vmem:[#allocation10 + $0x30] sm:$0xff]
    %v613 = vld [vmem:[#allocation10 + $0x38] sm:$0xff]
    %v614 = vld [vmem:[#allocation10 + $0x40] sm:$0xff]
    %v615 = vld [vmem:[#allocation10 + $0x48] sm:$0xff]
    %v616 = vld [vmem:[#allocation10 + $0x50] sm:$0xff]
    %v617 = vld [vmem:[#allocation10 + $0x58] sm:$0xff]
    %v618 = vld [vmem:[#allocation10 + $0x60] sm:$0xff]
    %v619 = vld [vmem:[#allocation10 + $0x68] sm:$0xff]
    %v620 = vld [vmem:[#allocation10 + $0x70] sm:$0xff]
    %v621 = vld [vmem:[#allocation10 + $0x78] sm:$0xff]
    %622 = vmatprep.subr.mxu0 0.0
    %623 = vmatpush1.msra.mxu0 %v621
    %624 = vmatprep.subr.mxu0 0.0
    %625 = vmatpush1.msra.mxu0 %v620
    %626 = vmatprep.subr.mxu0 0.0
    %627 = vmatpush1.msra.mxu0 %v619
    %628 = vmatprep.subr.mxu0 0.0
    %629 = vmatpush1.msra.mxu0 %v618
    %630 = vmatprep.subr.mxu0 0.0
    %631 = vmatpush1.msra.mxu0 %v617
    %632 = vmatprep.subr.mxu0 0.0
    %633 = vmatpush1.msra.mxu0 %v616
    %634 = vmatprep.subr.mxu0 0.0
    %635 = vmatpush1.msra.mxu0 %v615
    %636 = vmatprep.subr.mxu0 0.0
    %637 = vmatpush1.msra.mxu0 %v614
    %638 = vmatprep.subr.mxu0 0.0
    %639 = vmatpush1.msra.mxu0 %v613
    %640 = vmatprep.subr.mxu0 0.0
    %641 = vmatpush1.msra.mxu0 %v612
    %642 = vmatprep.subr.mxu0 0.0
    %643 = vmatpush1.msra.mxu0 %v611
    %644 = vmatprep.subr.mxu0 0.0
    %645 = vmatpush1.msra.mxu0 %v610
    %646 = vmatprep.subr.mxu0 0.0
    %647 = vmatpush1.msra.mxu0 %v609
    %648 = vmatprep.subr.mxu0 0.0
    %649 = vmatpush1.msra.mxu0 %v608
    %650 = vmatprep.subr.mxu0 0.0
    %651 = vmatpush1.msra.mxu0 %v607
    %652 = vmatprep.subr.mxu0 0.0
    %653 = vmatpush1.msra.mxu0 %v606
    %654 = vmatprep.subr.mxu0 0.0
    %655 = vmatpush2.msra.mxu0 0.0
    %656 = vmatprep.subr.mxu0 0.0
    %657 = vmatpush2.msra.mxu0 0.0
    %658 = vmatprep.subr.mxu0 0.0
    %659 = vmatpush2.msra.mxu0 0.0
    %660 = vmatprep.subr.mxu0 0.0
    %661 = vmatpush2.msra.mxu0 0.0
    %662 = vmatprep.subr.mxu0 0.0
    %663 = vmatpush2.msra.mxu0 0.0
    %664 = vmatprep.subr.mxu0 0.0
    %665 = vmatpush2.msra.mxu0 0.0
    %666 = vmatprep.subr.mxu0 0.0
    %667 = vmatpush2.msra.mxu0 0.0
    %668 = vmatprep.subr.mxu0 0.0
    %669 = vmatpush2.msra.mxu0 0.0
    %670 = vmatprep.subr.mxu0 0.0
    %671 = vmatpush2.msra.mxu0 0.0
    %672 = vmatprep.subr.mxu0 0.0
    %673 = vmatpush2.msra.mxu0 0.0
    %674 = vmatprep.subr.mxu0 0.0
    %675 = vmatpush2.msra.mxu0 0.0
    %676 = vmatprep.subr.mxu0 0.0
    %677 = vmatpush2.msra.mxu0 0.0
    %678 = vmatprep.subr.mxu0 0.0
    %679 = vmatpush2.msra.mxu0 0.0
    %680 = vmatprep.subr.mxu0 0.0
    %681 = vmatpush2.msra.mxu0 0.0
    %682 = vmatprep.subr.mxu0 0.0
    %683 = vmatpush2.msra.mxu0 0.0
    %684 = vmatprep.subr.mxu0 0.0
    %685 = vmatpush2.msra.mxu0 0.0
    %686 = vmatprep.mubr.f32.mxu0 0.0
    %687 = vmatmul.mubr.f32.gmra.mxu0 %v603
    %v688 = vpop.f32.mrf.mxu0
    %v689 = vadd.f32 0.0, %v688
    %v690 = vpop.f32.mrf.mxu0
    %691 = vmatprep.mubr.f32.mxu0 0.0
    %692 = vmatmul.mubr.f32.gmra.mxu0 %v605
    %v693 = vpop.f32.mrf.mxu0
    %v694 = vadd.f32 0.0, %v693
    %v695 = vpop.f32.mrf.mxu0
    %696 = vdwg.mxu0
    %v697 = vmax.f32 %v689, 1e-30
    %v698 = vmax.f32 %v694, 1e-30
    %v699 = vrcp.pop %v697
    %v700 = vmul.f32 %v603, %v699
    %v701 = vrcp.pop %v698
    %v702 = vmul.f32 %v605, %v701
    %v703 = vld [vmem:[#allocation11] sm:$0xff]
    %v704 = vld [vmem:[#allocation11 + $0x8] sm:$0xff]
    %v705 = vld [vmem:[#allocation11 + $0x10] sm:$0xff]
    %v706 = vld [vmem:[#allocation11 + $0x18] sm:$0xff]
    %v707 = vld [vmem:[#allocation11 + $0x20] sm:$0xff]
    %v708 = vld [vmem:[#allocation11 + $0x28] sm:$0xff]
    %v709 = vld [vmem:[#allocation11 + $0x30] sm:$0xff]
    %v710 = vld [vmem:[#allocation11 + $0x38] sm:$0xff]
    %v711 = vld [vmem:[#allocation11 + $0x40] sm:$0xff]
    %v712 = vld [vmem:[#allocation11 + $0x48] sm:$0xff]
    %v713 = vld [vmem:[#allocation11 + $0x50] sm:$0xff]
    %v714 = vld [vmem:[#allocation11 + $0x58] sm:$0xff]
    %v715 = vld [vmem:[#allocation11 + $0x60] sm:$0xff]
    %v716 = vld [vmem:[#allocation11 + $0x68] sm:$0xff]
    %v717 = vld [vmem:[#allocation11 + $0x70] sm:$0xff]
    %v718 = vld [vmem:[#allocation11 + $0x78] sm:$0xff]
    %719 = vmatprep.subr.mxu0 0.0
    %720 = vmatpush1.msra.mxu0 %v718
    %721 = vmatprep.subr.mxu0 0.0
    %722 = vmatpush1.msra.mxu0 %v717
    %723 = vmatprep.subr.mxu0 0.0
    %724 = vmatpush1.msra.mxu0 %v716
    %725 = vmatprep.subr.mxu0 0.0
    %726 = vmatpush1.msra.mxu0 %v715
    %727 = vmatprep.subr.mxu0 0.0
    %728 = vmatpush1.msra.mxu0 %v714
    %729 = vmatprep.subr.mxu0 0.0
    %730 = vmatpush1.msra.mxu0 %v713
    %731 = vmatprep.subr.mxu0 0.0
    %732 = vmatpush1.msra.mxu0 %v712
    %733 = vmatprep.subr.mxu0 0.0
    %734 = vmatpush1.msra.mxu0 %v711
    %735 = vmatprep.subr.mxu0 0.0
    %736 = vmatpush1.msra.mxu0 %v710
    %737 = vmatprep.subr.mxu0 0.0
    %738 = vmatpush1.msra.mxu0 %v709
    %739 = vmatprep.subr.mxu0 0.0
    %740 = vmatpush1.msra.mxu0 %v708
    %741 = vmatprep.subr.mxu0 0.0
    %742 = vmatpush1.msra.mxu0 %v707
    %743 = vmatprep.subr.mxu0 0.0
    %744 = vmatpush1.msra.mxu0 %v706
    %745 = vmatprep.subr.mxu0 0.0
    %746 = vmatpush1.msra.mxu0 %v705
    %747 = vmatprep.subr.mxu0 0.0
    %748 = vmatpush1.msra.mxu0 %v704
    %749 = vmatprep.subr.mxu0 0.0
    %750 = vmatpush1.msra.mxu0 %v703
    %751 = vmatprep.subr.mxu0 0.0
    %752 = vmatpush2.msra.mxu0 0.0
    %753 = vmatprep.subr.mxu0 0.0
    %754 = vmatpush2.msra.mxu0 0.0
    %755 = vmatprep.subr.mxu0 0.0
    %756 = vmatpush2.msra.mxu0 0.0
    %757 = vmatprep.subr.mxu0 0.0
    %758 = vmatpush2.msra.mxu0 0.0
    %759 = vmatprep.subr.mxu0 0.0
    %760 = vmatpush2.msra.mxu0 0.0
    %761 = vmatprep.subr.mxu0 0.0
    %762 = vmatpush2.msra.mxu0 0.0
    %763 = vmatprep.subr.mxu0 0.0
    %764 = vmatpush2.msra.mxu0 0.0
    %765 = vmatprep.subr.mxu0 0.0
    %766 = vmatpush2.msra.mxu0 0.0
    %767 = vmatprep.subr.mxu0 0.0
    %768 = vmatpush2.msra.mxu0 0.0
    %769 = vmatprep.subr.mxu0 0.0
    %770 = vmatpush2.msra.mxu0 0.0
    %771 = vmatprep.subr.mxu0 0.0
    %772 = vmatpush2.msra.mxu0 0.0
    %773 = vmatprep.subr.mxu0 0.0
    %774 = vmatpush2.msra.mxu0 0.0
    %775 = vmatprep.subr.mxu0 0.0
    %776 = vmatpush2.msra.mxu0 0.0
    %777 = vmatprep.subr.mxu0 0.0
    %778 = vmatpush2.msra.mxu0 0.0
    %779 = vmatprep.subr.mxu0 0.0
    %780 = vmatpush2.msra.mxu0 0.0
    %781 = vmatprep.subr.mxu0 0.0
    %782 = vmatpush2.msra.mxu0 0.0
    %783 = vmatprep.mubr.f32.mxu0 0.0
    %784 = vmatmul.mubr.f32.gmra.mxu0 %v700
    %v785 = vpop.f32.mrf.mxu0
    %v786 = vadd.f32 0.0, %v785
    %v787 = vpop.f32.mrf.mxu0
    %788 = vmatprep.mubr.f32.mxu0 0.0
    %789 = vmatmul.mubr.f32.gmra.mxu0 %v702
    %v790 = vpop.f32.mrf.mxu0
    %v791 = vadd.f32 0.0, %v790
    %v792 = vpop.f32.mrf.mxu0
    %793 = vdwg.mxu0
    %v794 = vmul.f32 %v786, 0.1
    %v795 = vmul.f32 %v791, 0.1
    %v796 = vmax.f32 %v794, 0.0
    %v797 = vmax.f32 %v795, 0.0
    %v798 = vmin.f32 %v796, 1.0
    %v799 = vmin.f32 %v797, 1.0
    %800 = vst [vmem:[#allocation14] sm:$0xff] 0.0
    %801 = vst [vmem:[#allocation14 + $0x8] sm:$0xff] 0.0
    %vm802 = vcmask 64512
    %803 = vst.msk [vmem:[#allocation14] sm:$0xff] %vm802, %v798
    %804 = vst.msk [vmem:[#allocation14 + $0x8] sm:$0xff] %vm802, %v799
    %807 = vrot.lane.b32.xlu0 %v269, 8
    %v808 = vpop.permute.xlu0 %807
    %809 = vrot.lane.b32.xlu0 %v270, 8
    %v810 = vpop.permute.xlu0 %809
    %vm813 = vcmask 130112
    %814 = vst.msk [vmem:[#allocation14] sm:$0xff] %vm813, %v808
    %815 = vst.msk [vmem:[#allocation14 + $0x8] sm:$0xff] %vm813, %v810
    %818 = vrot.lane.b32.xlu0 %v391, 16
    %v819 = vpop.permute.xlu0 %818
    %820 = vrot.lane.b32.xlu0 %v392, 16
    %v821 = vpop.permute.xlu0 %820
    %vm824 = vcmask 195712
    %825 = vst.msk [vmem:[#allocation14] sm:$0xff] %vm824, %v819
    %826 = vst.msk [vmem:[#allocation14 + $0x8] sm:$0xff] %vm824, %v821
    // Predicated region
    $region66: #{tpu_custom_call.1} parent=1 // pred_check
      _
    $region67: #{tpu_custom_call.1} parent=1 // pred_check_branch
      %828 = sbr.rel (0) target = $region69
    $region68: #{tpu_custom_call.1} parent=1 // pred_region
      %s830 = ssub.s32 256, 256
      %831 = vsyncadd [#allocation4], %s830
      %s832 = sshll.u32 [#allocation14], 4
      %s833 = int_to_ptr.vmem [resolvable:$true] %s832
      %838 = dma.vmem_to_hbm [thread:$0]  %s833, 256, %s9, [#allocation4], 128, 128, 8
    $region69: #{tpu_custom_call.1} parent=1 // pred_fallthru
      _
    // Predicated region
    $region70: #{tpu_custom_call.1} parent=1 // pred_check
      _
    $region71: #{tpu_custom_call.1} parent=1 // pred_check_branch
      %840 = sbr.rel (0) target = $region73
    $region72: #{tpu_custom_call.1} parent=1 // pred_region
      %841 = dma.done [#allocation4], 256
    $region73: #{tpu_custom_call.1} parent=1 // pred_fallthru
      _
    %842 = vsyncpa [#allocation3], 1
    %843 = vsyncpa [#allocation6], 1
    %844 = vsyncpa [#allocation9], 1
    %845 = vsyncpa [#allocation12], 1
    %846 = vsyncpa [#allocation4], 1

</llo_original>
